<compile_context>
chip_gen: v7x
topology: tpu7x:2x2x1
jax: 0.10.0
libtpu: 0.0.40
codegen_flags: <defaults>
</compile_context>

<pallas_src>
import functools

import jax
import jax.numpy as jnp
from jax.experimental import pallas as pl
from jax.experimental.pallas import tpu as pltpu


def _round_up(n: int, m: int) -> int:
    return ((n + m - 1) // m) * m


def _mlp_kernel(*refs, num_layers: int, out_dim: int):
    # refs = (x_ref, w1_ref, b1_ref, ..., wL_ref, bL_ref, o_ref)
    #   x : [TB, Din0]           (batch tile, Din0 NOT lane-padded)
    #   wi: [Din_i, Dout_i_pad]  (pre-transposed, resident in VMEM)
    #   bi: [1, Dout_i_pad]
    #   o : [TB, out_dim]        (unpadded output block)
    x_ref = refs[0]
    o_ref = refs[-1]
    a = x_ref[...]
    # TODO(synk): for deep uniform-width nets, stack hidden weights into one
    # [L, D, D] ref and loop with lax.fori_loop instead of this static unroll.
    for i in range(num_layers):
        w = refs[1 + 2 * i][...]
        b = refs[2 + 2 * i][...]
        if w.shape[0] == 1:
            # K == 1 layer (the width-1 PINN coordinate input): pure VPU
            # broadcast instead of an MXU pass.
            z = a * w + b
        else:
            z = jnp.dot(a, w, preferred_element_type=jnp.float32) + b
        a = jnp.tanh(z) if i < num_layers - 1 else z
    # Lane-slice away feature padding of the last layer before storing, so the
    # HBM write is only the real out_dim columns.
    o_ref[...] = a[:, :out_dim]


def init_resnet_params(layers, key):
    """Deterministic params matching the PyTorch module:
    xavier_normal_(weight, gain=1.0), zeros_(bias). W is [Dout, Din]."""
    params = []
    for i in range(len(layers) - 1):
        fan_in, fan_out = layers[i], layers[i + 1]
        key, sub = jax.random.split(key)
        std = (2.0 / (fan_in + fan_out)) ** 0.5
        w = std * jax.random.normal(sub, (fan_out, fan_in), dtype=jnp.float32)
        b = jnp.zeros((fan_out,), dtype=jnp.float32)
        params.append((w, b))
    return params


def prepare_params(params):
    """One-time prep: cast to f32, transpose to [Din, Dout], lane-pad feature
    dims to multiples of 128 -- EXCEPT the first layer's Din, which is kept at
    its real width so the input never gets 128x-inflated in HBM.  Zero padding
    is exact: padded weight rows/cols and biases are 0 and tanh(0)=0."""
    prepared = []
    for idx, (w, b) in enumerate(params):
        dout, din = w.shape
        din_p = din if idx == 0 else _round_up(din, 128)
        dout_p = _round_up(dout, 128)
        wt = (
            jnp.zeros((din_p, dout_p), jnp.float32)
            .at[:din, :dout]
            .set(w.astype(jnp.float32).T)
        )
        bp = (
            jnp.zeros((1, dout_p), jnp.float32)
            .at[:, :dout]
            .set(b.astype(jnp.float32).reshape(1, dout))
        )
        prepared.append((wt, bp))
    return prepared


def _resident_spec(shape, single_buffer):
    """BlockSpec for a weight/bias that is the same block at every grid step.
    Constant index_map -> fetched once; Buffered(1) drops the useless second
    pipeline buffer (matters once params reach MiB scale)."""
    if single_buffer:
        return pl.BlockSpec(shape, lambda i: (0, 0), pipeline_mode=pl.Buffered(1))
    return pl.BlockSpec(shape, lambda i: (0, 0))


def resnet_forward(prepared, x, out_dim, *, block_batch=1024):
    """Fused forward pass: one pallas_call for the whole MLP, tiled over batch."""
    B, din = x.shape
    assert din == prepared[0][0].shape[0], "x width must match first layer Din"
    num_layers = len(prepared)

    # --- batch tile selection -------------------------------------------------
    TB = min(_round_up(block_batch, 8), _round_up(B, 8))
    # v7x: keep >= 2 grid steps so both TensorCores get work; shrink TB rather
    # than letting the grid collapse to one step (harmless on v5e/v6e: 1 TC).
    while TB > 8 and pl.cdiv(B, TB) < 2:
        TB = _round_up(TB // 2, 8)
    B_pad = _round_up(B, TB)
    grid = (B_pad // TB,)

    # Pad only the batch tail (tiny: din * pad_rows * 4 B), never the lanes.
    x_f = x.astype(jnp.float32)
    x_in = x_f if B_pad == B else jnp.pad(x_f, ((0, B_pad - B), (0, 0)))

    # --- explicit VMEM budget ---------------------------------------------------
    # 2x (in + out tiles, double-buffered) + live activations + params
    # (worst case double-buffered), + headroom; capped at 64 MiB = smallest
    # physical VMEM across generations (v7x), floored at a safe 16 MiB.
    def _slab(rows, cols):  # f32 VMEM footprint of a [rows, cols] block
        return _round_up(max(rows, 8), 8) * _round_up(cols, 128) * 4

    param_bytes = sum(_slab(*w.shape) + _slab(*b.shape) for w, b in prepared)
    widest = max(w.shape[1] for w, _ in prepared)
    est = (
        2 * _slab(TB, din)
        + 2 * _slab(TB, out_dim)
        + (num_layers + 1) * _slab(TB, widest)
        + 2 * param_bytes
    )
    vmem_limit = int(min(64 << 20, max(est + (8 << 20), 16 << 20)))

    kernel = functools.partial(_mlp_kernel, num_layers=num_layers, out_dim=out_dim)

    def _build_and_run(single_buffer):
        in_specs = [pl.BlockSpec((TB, din), lambda i: (i, 0))]
        flat_params = []
        for wt, bp in prepared:
            in_specs.append(_resident_spec(wt.shape, single_buffer))
            in_specs.append(_resident_spec(bp.shape, single_buffer))
            flat_params.extend([wt, bp])
        return pl.pallas_call(
            kernel,
            out_shape=jax.ShapeDtypeStruct((B_pad, out_dim), jnp.float32),
            grid=grid,
            in_specs=in_specs,
            out_specs=pl.BlockSpec((TB, out_dim), lambda i: (i, 0)),
            compiler_params=pltpu.CompilerParams(
                dimension_semantics=("parallel",),
                vmem_limit_bytes=vmem_limit,
            ),
        )(x_in, *flat_params)

    try:
        out = _build_and_run(single_buffer=True)
    except Exception:
        # Installed JAX without per-BlockSpec pipeline_mode / Buffered(1):
        # fall back to default (double-buffered) resident blocks.
        out = _build_and_run(single_buffer=False)

    return out[:B]  # drop batch-tail padding; columns are already exact


if __name__ == "__main__":
    # PINN-like configuration: 1-D coordinate, two hidden layers, scalar output.
    layers = [1, 32, 32, 1]
    batch = 64  # small, but >= 2 grid steps after TB auto-shrink

    key = jax.random.PRNGKey(0)
    key, k_x = jax.random.split(key)
    x = jax.random.uniform(k_x, (batch, layers[0]), dtype=jnp.float32)

    params = init_resnet_params(layers, key)
    prepared = prepare_params(params)

    out = resnet_forward(prepared, x, out_dim=layers[-1])
    out = jax.block_until_ready(out)

    # Pure-JAX reference (same math as the PyTorch forward).
    a_ref = x.astype(jnp.float32)
    for i, (w, b) in enumerate(params):
        a_ref = a_ref @ w.T + b
        if i < len(params) - 1:
            a_ref = jnp.tanh(a_ref)
    assert out.shape == (batch, layers[-1])
    assert jnp.allclose(out, a_ref, atol=1e-5, rtol=1e-5)

    # TODO(synk): loss_BC / loss_PDE / PDE (autograd-based training losses) are
    # not part of the forward kernel; they would be built with jax.grad on top.

    print("KERNEL_OK")
</pallas_src>

<mosaic_0001>
module attributes {stable_mosaic.version = 11 : i64} {
  func.func @_mlp_kernel(%arg0: i32, %arg1: memref<32x1xf32, #tpu.memory_space<vmem>>, %arg2: memref<1x128xf32, #tpu.memory_space<vmem>>, %arg3: memref<1x128xf32, #tpu.memory_space<vmem>>, %arg4: memref<128x128xf32, #tpu.memory_space<vmem>>, %arg5: memref<1x128xf32, #tpu.memory_space<vmem>>, %arg6: memref<128x128xf32, #tpu.memory_space<vmem>>, %arg7: memref<1x128xf32, #tpu.memory_space<vmem>>, %arg8: memref<32x1xf32, #tpu.memory_space<vmem>>) attributes {dimension_semantics = [#tpu.dimension_semantics<parallel>], iteration_bounds = array<i64: 2>, scalar_prefetch = 0 : i64, scratch_operands = 0 : i64, tpu.core_type = #tpu.core_type<tc>, window_params = [{transform_indices = @transform_0, window_bounds = array<i64: 32, 1>}, {pipeline_mode = #tpu.pipeline_mode<synchronous>, transform_indices = @transform_1, window_bounds = array<i64: 1, 128>}, {pipeline_mode = #tpu.pipeline_mode<synchronous>, transform_indices = @transform_2, window_bounds = array<i64: 1, 128>}, {pipeline_mode = #tpu.pipeline_mode<synchronous>, transform_indices = @transform_3, window_bounds = array<i64: 128, 128>}, {pipeline_mode = #tpu.pipeline_mode<synchronous>, transform_indices = @transform_4, window_bounds = array<i64: 1, 128>}, {pipeline_mode = #tpu.pipeline_mode<synchronous>, transform_indices = @transform_5, window_bounds = array<i64: 128, 128>}, {pipeline_mode = #tpu.pipeline_mode<synchronous>, transform_indices = @transform_6, window_bounds = array<i64: 1, 128>}, {transform_indices = @transform_7, window_bounds = array<i64: 32, 1>}]} {
    %c0 = arith.constant 0 : index
    %c0_0 = arith.constant 0 : index
    %0 = vector.load %arg1[%c0, %c0_0] : memref<32x1xf32, #tpu.memory_space<vmem>>, vector<32x1xf32>
    %c0_1 = arith.constant 0 : index
    %c0_2 = arith.constant 0 : index
    %1 = vector.load %arg2[%c0_1, %c0_2] : memref<1x128xf32, #tpu.memory_space<vmem>>, vector<1x128xf32>
    %c0_3 = arith.constant 0 : index
    %c0_4 = arith.constant 0 : index
    %2 = vector.load %arg3[%c0_3, %c0_4] : memref<1x128xf32, #tpu.memory_space<vmem>>, vector<1x128xf32>
    %3 = vector.broadcast %0 : vector<32x1xf32> to vector<32x128xf32>
    %4 = vector.broadcast %1 : vector<1x128xf32> to vector<32x128xf32>
    %5 = arith.mulf %3, %4 : vector<32x128xf32>
    %6 = vector.broadcast %2 : vector<1x128xf32> to vector<32x128xf32>
    %7 = arith.addf %5, %6 : vector<32x128xf32>
    %8 = math.tanh %7 : vector<32x128xf32>
    %c0_5 = arith.constant 0 : index
    %c0_6 = arith.constant 0 : index
    %9 = vector.load %arg4[%c0_5, %c0_6] : memref<128x128xf32, #tpu.memory_space<vmem>>, vector<128x128xf32>
    %c0_7 = arith.constant 0 : index
    %c0_8 = arith.constant 0 : index
    %10 = vector.load %arg5[%c0_7, %c0_8] : memref<1x128xf32, #tpu.memory_space<vmem>>, vector<1x128xf32>
    %cst = arith.constant dense<0.000000e+00> : vector<32x128xf32>
    %11 = tpu.matmul %8, %9, %cst {dimension_numbers = #tpu.dot_dimension_numbers<[1], [0], [0], [1], [0, 0, 1, 1], [], []>} : vector<32x128xf32>, vector<128x128xf32>, vector<32x128xf32> -> vector<32x128xf32>
    %12 = vector.broadcast %10 : vector<1x128xf32> to vector<32x128xf32>
    %13 = arith.addf %11, %12 : vector<32x128xf32>
    %14 = math.tanh %13 : vector<32x128xf32>
    %c0_9 = arith.constant 0 : index
    %c0_10 = arith.constant 0 : index
    %15 = vector.load %arg6[%c0_9, %c0_10] : memref<128x128xf32, #tpu.memory_space<vmem>>, vector<128x128xf32>
    %c0_11 = arith.constant 0 : index
    %c0_12 = arith.constant 0 : index
    %16 = vector.load %arg7[%c0_11, %c0_12] : memref<1x128xf32, #tpu.memory_space<vmem>>, vector<1x128xf32>
    %cst_13 = arith.constant dense<0.000000e+00> : vector<32x128xf32>
    %17 = tpu.matmul %14, %15, %cst_13 {dimension_numbers = #tpu.dot_dimension_numbers<[1], [0], [0], [1], [0, 0, 1, 1], [], []>} : vector<32x128xf32>, vector<128x128xf32>, vector<32x128xf32> -> vector<32x128xf32>
    %18 = vector.broadcast %16 : vector<1x128xf32> to vector<32x128xf32>
    %19 = arith.addf %17, %18 : vector<32x128xf32>
    %20 = vector.extract_strided_slice %19 {offsets = [0, 0], sizes = [32, 1], strides = [1, 1]} : vector<32x128xf32> to vector<32x1xf32>
    %c0_14 = arith.constant 0 : index
    %c0_15 = arith.constant 0 : index
    %21 = vector.load %arg8[%c0_14, %c0_15] : memref<32x1xf32, #tpu.memory_space<vmem>>, vector<32x1xf32>
    tpu.vector_store %arg8[%c0_14, %c0_15], %20 {strides = array<i32>} : memref<32x1xf32, #tpu.memory_space<vmem>>, vector<32x1xf32>,
    return
  }
  func.func @transform_0(%arg0: i32) -> (i32, i32) {
    %c0_i32 = arith.constant 0 : i32
    %c0_i32_0 = arith.constant 0 : i32
    return %arg0, %c0_i32 : i32, i32
  }
  func.func @transform_1(%arg0: i32) -> (i32, i32) {
    %c0_i32 = arith.constant 0 : i32
    %c0_i32_0 = arith.constant 0 : i32
    %c0_i32_1 = arith.constant 0 : i32
    return %c0_i32, %c0_i32_0 : i32, i32
  }
  func.func @transform_2(%arg0: i32) -> (i32, i32) {
    %c0_i32 = arith.constant 0 : i32
    %c0_i32_0 = arith.constant 0 : i32
    %c0_i32_1 = arith.constant 0 : i32
    return %c0_i32, %c0_i32_0 : i32, i32
  }
  func.func @transform_3(%arg0: i32) -> (i32, i32) {
    %c0_i32 = arith.constant 0 : i32
    %c0_i32_0 = arith.constant 0 : i32
    %c0_i32_1 = arith.constant 0 : i32
    return %c0_i32, %c0_i32_0 : i32, i32
  }
  func.func @transform_4(%arg0: i32) -> (i32, i32) {
    %c0_i32 = arith.constant 0 : i32
    %c0_i32_0 = arith.constant 0 : i32
    %c0_i32_1 = arith.constant 0 : i32
    return %c0_i32, %c0_i32_0 : i32, i32
  }
  func.func @transform_5(%arg0: i32) -> (i32, i32) {
    %c0_i32 = arith.constant 0 : i32
    %c0_i32_0 = arith.constant 0 : i32
    %c0_i32_1 = arith.constant 0 : i32
    return %c0_i32, %c0_i32_0 : i32, i32
  }
  func.func @transform_6(%arg0: i32) -> (i32, i32) {
    %c0_i32 = arith.constant 0 : i32
    %c0_i32_0 = arith.constant 0 : i32
    %c0_i32_1 = arith.constant 0 : i32
    return %c0_i32, %c0_i32_0 : i32, i32
  }
  func.func @transform_7(%arg0: i32) -> (i32, i32) {
    %c0_i32 = arith.constant 0 : i32
    %c0_i32_0 = arith.constant 0 : i32
    return %arg0, %c0_i32 : i32, i32
  }
}

module attributes {stable_mosaic.version = 11 : i64} {
  func.func @_mlp_kernel(%arg0: i32, %arg1: memref<32x1xf32, #tpu.memory_space<vmem>>, %arg2: memref<1x128xf32, #tpu.memory_space<vmem>>, %arg3: memref<1x128xf32, #tpu.memory_space<vmem>>, %arg4: memref<128x128xf32, #tpu.memory_space<vmem>>, %arg5: memref<1x128xf32, #tpu.memory_space<vmem>>, %arg6: memref<128x128xf32, #tpu.memory_space<vmem>>, %arg7: memref<1x128xf32, #tpu.memory_space<vmem>>, %arg8: memref<32x1xf32, #tpu.memory_space<vmem>>) attributes {dimension_semantics = [#tpu.dimension_semantics<parallel>], iteration_bounds = array<i64: 2>, scalar_prefetch = 0 : i64, scratch_operands = 0 : i64, tpu.core_type = #tpu.core_type<tc>, window_params = [{transform_indices = @transform_0, window_bounds = array<i64: 32, 1>}, {pipeline_mode = #tpu.pipeline_mode<synchronous>, transform_indices = @transform_1, window_bounds = array<i64: 1, 128>}, {pipeline_mode = #tpu.pipeline_mode<synchronous>, transform_indices = @transform_2, window_bounds = array<i64: 1, 128>}, {pipeline_mode = #tpu.pipeline_mode<synchronous>, transform_indices = @transform_3, window_bounds = array<i64: 128, 128>}, {pipeline_mode = #tpu.pipeline_mode<synchronous>, transform_indices = @transform_4, window_bounds = array<i64: 1, 128>}, {pipeline_mode = #tpu.pipeline_mode<synchronous>, transform_indices = @transform_5, window_bounds = array<i64: 128, 128>}, {pipeline_mode = #tpu.pipeline_mode<synchronous>, transform_indices = @transform_6, window_bounds = array<i64: 1, 128>}, {transform_indices = @transform_7, window_bounds = array<i64: 32, 1>}]} {
    %c0 = arith.constant 0 : index
    %c0_0 = arith.constant 0 : index
    %0 = vector.load %arg1[%c0, %c0_0] : memref<32x1xf32, #tpu.memory_space<vmem>>, vector<32x1xf32>
    %c0_1 = arith.constant 0 : index
    %c0_2 = arith.constant 0 : index
    %1 = vector.load %arg2[%c0_1, %c0_2] : memref<1x128xf32, #tpu.memory_space<vmem>>, vector<1x128xf32>
    %c0_3 = arith.constant 0 : index
    %c0_4 = arith.constant 0 : index
    %2 = vector.load %arg3[%c0_3, %c0_4] : memref<1x128xf32, #tpu.memory_space<vmem>>, vector<1x128xf32>
    %3 = vector.broadcast %0 : vector<32x1xf32> to vector<32x128xf32>
    %4 = vector.broadcast %1 : vector<1x128xf32> to vector<32x128xf32>
    %5 = arith.mulf %3, %4 : vector<32x128xf32>
    %6 = vector.broadcast %2 : vector<1x128xf32> to vector<32x128xf32>
    %7 = arith.addf %5, %6 : vector<32x128xf32>
    %8 = math.tanh %7 : vector<32x128xf32>
    %c0_5 = arith.constant 0 : index
    %c0_6 = arith.constant 0 : index
    %9 = vector.load %arg4[%c0_5, %c0_6] : memref<128x128xf32, #tpu.memory_space<vmem>>, vector<128x128xf32>
    %c0_7 = arith.constant 0 : index
    %c0_8 = arith.constant 0 : index
    %10 = vector.load %arg5[%c0_7, %c0_8] : memref<1x128xf32, #tpu.memory_space<vmem>>, vector<1x128xf32>
    %cst = arith.constant dense<0.000000e+00> : vector<32x128xf32>
    %11 = tpu.matmul %8, %9, %cst {dimension_numbers = #tpu.dot_dimension_numbers<[1], [0], [0], [1], [0, 0, 1, 1], [], []>} : vector<32x128xf32>, vector<128x128xf32>, vector<32x128xf32> -> vector<32x128xf32>
    %12 = vector.broadcast %10 : vector<1x128xf32> to vector<32x128xf32>
    %13 = arith.addf %11, %12 : vector<32x128xf32>
    %14 = math.tanh %13 : vector<32x128xf32>
    %c0_9 = arith.constant 0 : index
    %c0_10 = arith.constant 0 : index
    %15 = vector.load %arg6[%c0_9, %c0_10] : memref<128x128xf32, #tpu.memory_space<vmem>>, vector<128x128xf32>
    %c0_11 = arith.constant 0 : index
    %c0_12 = arith.constant 0 : index
    %16 = vector.load %arg7[%c0_11, %c0_12] : memref<1x128xf32, #tpu.memory_space<vmem>>, vector<1x128xf32>
    %cst_13 = arith.constant dense<0.000000e+00> : vector<32x128xf32>
    %17 = tpu.matmul %14, %15, %cst_13 {dimension_numbers = #tpu.dot_dimension_numbers<[1], [0], [0], [1], [0, 0, 1, 1], [], []>} : vector<32x128xf32>, vector<128x128xf32>, vector<32x128xf32> -> vector<32x128xf32>
    %18 = vector.broadcast %16 : vector<1x128xf32> to vector<32x128xf32>
    %19 = arith.addf %17, %18 : vector<32x128xf32>
    %20 = vector.extract_strided_slice %19 {offsets = [0, 0], sizes = [32, 1], strides = [1, 1]} : vector<32x128xf32> to vector<32x1xf32>
    %c0_14 = arith.constant 0 : index
    %c0_15 = arith.constant 0 : index
    %21 = vector.load %arg8[%c0_14, %c0_15] : memref<32x1xf32, #tpu.memory_space<vmem>>, vector<32x1xf32>
    tpu.vector_store %arg8[%c0_14, %c0_15], %20 {strides = array<i32>} : memref<32x1xf32, #tpu.memory_space<vmem>>, vector<32x1xf32>,
    return
  }
  func.func @transform_0(%arg0: i32) -> (i32, i32) {
    %c0_i32 = arith.constant 0 : i32
    %c0_i32_0 = arith.constant 0 : i32
    return %arg0, %c0_i32 : i32, i32
  }
  func.func @transform_1(%arg0: i32) -> (i32, i32) {
    %c0_i32 = arith.constant 0 : i32
    %c0_i32_0 = arith.constant 0 : i32
    %c0_i32_1 = arith.constant 0 : i32
    return %c0_i32, %c0_i32_0 : i32, i32
  }
  func.func @transform_2(%arg0: i32) -> (i32, i32) {
    %c0_i32 = arith.constant 0 : i32
    %c0_i32_0 = arith.constant 0 : i32
    %c0_i32_1 = arith.constant 0 : i32
    return %c0_i32, %c0_i32_0 : i32, i32
  }
  func.func @transform_3(%arg0: i32) -> (i32, i32) {
    %c0_i32 = arith.constant 0 : i32
    %c0_i32_0 = arith.constant 0 : i32
    %c0_i32_1 = arith.constant 0 : i32
    return %c0_i32, %c0_i32_0 : i32, i32
  }
  func.func @transform_4(%arg0: i32) -> (i32, i32) {
    %c0_i32 = arith.constant 0 : i32
    %c0_i32_0 = arith.constant 0 : i32
    %c0_i32_1 = arith.constant 0 : i32
    return %c0_i32, %c0_i32_0 : i32, i32
  }
  func.func @transform_5(%arg0: i32) -> (i32, i32) {
    %c0_i32 = arith.constant 0 : i32
    %c0_i32_0 = arith.constant 0 : i32
    %c0_i32_1 = arith.constant 0 : i32
    return %c0_i32, %c0_i32_0 : i32, i32
  }
  func.func @transform_6(%arg0: i32) -> (i32, i32) {
    %c0_i32 = arith.constant 0 : i32
    %c0_i32_0 = arith.constant 0 : i32
    %c0_i32_1 = arith.constant 0 : i32
    return %c0_i32, %c0_i32_0 : i32, i32
  }
  func.func @transform_7(%arg0: i32) -> (i32, i32) {
    %c0_i32 = arith.constant 0 : i32
    %c0_i32_0 = arith.constant 0 : i32
    return %arg0, %c0_i32 : i32, i32
  }
}

</mosaic_0001>

<llo_original>
// kernel: tpu_custom_call.1
$region0: #{tpu_custom_call.1}
  #allocation0 [shape = 'u32[]', space=smem, size = 0x4, offset = 0x4, fixed_abs, tag = 'smem constant byte address 0x4 - core index']
  #allocation1 [shape = 'u32[144,128]{1,0:T(1,128)}', space=vmem, size = 0x12000, scoped, tag = 'internal scratch']
  %s0 = inlined_call_operand.vmem [shape: f32[64,1], index: 0, kind: input, shape index: {}]
  %s1 = inlined_call_operand.vmem [shape: f32[1,128], index: 1, kind: input, shape index: {}]
  %s2 = inlined_call_operand.vmem [shape: f32[1,128], index: 2, kind: input, shape index: {}]
  %s3 = inlined_call_operand.hbm [shape: f32[128,128], index: 3, kind: input, shape index: {}]
  %s4 = inlined_call_operand.vmem [shape: f32[1,128], index: 4, kind: input, shape index: {}]
  %s5 = inlined_call_operand.hbm [shape: f32[128,128], index: 5, kind: input, shape index: {}]
  %s6 = inlined_call_operand.vmem [shape: f32[1,128], index: 6, kind: input, shape index: {}]
  %s7 = inlined_call_operand.vmem [shape: f32[64,1], index: 7, kind: output, shape index: {}]
  %s8 = sld [smem:[#allocation0]]
  $region69: #{tpu_custom_call.1} parent=0
    _
  %s10 = ssub.s32 1, %s8
  %s11 = scalar_select 0, %s10, %s8
  $region1: #{tpu_custom_call.1} parent=0
    #allocation2 [shape = 'u8[65536]{0}', space=vmem, size = 0x10000, scoped, tag = 'input window, operand 3, single buffered']
    #allocation3 [shape = 's32[2]{0}', space=sflag, size = 0x8, scoped, tag = 'scoped memory for tpu_custom_call.1']
    #allocation4 [shape = 'u8[65536]{0}', space=vmem, size = 0x10000, scoped, tag = 'input window, operand 5, single buffered']
    #allocation5 [shape = 's32[1]{0}', space=sflag, size = 0x4, scoped, tag = 'scoped memory for tpu_custom_call.1']
    %12 = vsyncpa [#allocation3], 0
    %13 = vsyncpa [#allocation5], 0
    loop: start=0, step=1, limit=4
    $region2: #{tpu_custom_call.1} parent=1 // loop_pre_header
      _
    $region3: #{tpu_custom_call.1} parent=1 // loop_header
      %s15 = sphi 0, %s19
      %p16 = scmp.ge.s32.totalorder %s15, 4
      %s25 = sphi 0, %s27
      %s28 = sphi 0, %s25
      %s29 = sphi 0, %s28
      %s45 = sphi 0, %s29
      %s49 = sphi 0, %s49
      %s51 = sphi 0, %s49
      %s52 = sphi 0, %s51
      %s66 = sphi 0, %s52
      %s70 = sphi 0, %s70
      %s72 = sphi 0, %s70
      %s73 = sphi 0, %s72
      %s87 = sphi 0, %s73
      %s91 = sphi 0, %s91
      %s93 = sphi 0, %s91
      %s94 = sphi 0, %s93
      %s108 = sphi 0, %s94
      %s112 = sphi 0, %s112
      %s114 = sphi 0, %s112
      %s115 = sphi 0, %s114
      %s129 = sphi 0, %s115
      %s133 = sphi 0, %s133
      %s135 = sphi 0, %s133
      %s136 = sphi 0, %s135
      %s150 = sphi 0, %s136
      %s154 = sphi 0, %s154
      %s156 = sphi 0, %s154
      %s157 = sphi 0, %s156
      %s171 = sphi 0, %s157
      %s177 = sphi 0, %s179
      %s180 = sphi 0, %s177
      %s181 = sphi 0, %s180
      %s197 = sphi 0, %s181
    $region4: #{tpu_custom_call.1} parent=1 // loop_header_branch
      %18 = sbr.rel (%p16) target = $region8
    $region5: #{tpu_custom_call.1} parent=1 // loop_body
      %s20 = ssub.s32 %s15, 1
      %s21 = ssub.s32 %s15, 2
      %s22 = sadd.s32 %s15, 1
      %s23 = ssub.s32 %s15, %s22
      %p24 = scmp.eq.s32.totalorder %s23, 0
      %s26 = sadd.s32 %s25, 1
      %s27 = scalar_select %p24, %s25, %s26
      %p30 = pneg %p24
      %p31 = scmp.eq.s32.totalorder %s15, 1
      %p32 = por %p30, %p31
      %p33 = scmp.ne.s32.totalorder %s25, %s28
      %p34 = scmp.eq.s32.totalorder %s15, 0
      %p35 = por %p33, %p34
      %p36 = scmp.ne.s32.totalorder %s25, %s28
      %p37 = scmp.eq.s32.totalorder %s20, 1
      %p38 = por %p36, %p37
      %p39 = scmp.ne.s32.totalorder %s28, %s29
      %p40 = scmp.eq.s32.totalorder %s20, 0
      %p41 = por %p39, %p40
      %p42 = scmp.ne.s32.totalorder %s28, %s29
      %p43 = scmp.eq.s32.totalorder %s21, 1
      %p44 = por %p42, %p43
      %p46 = scmp.ne.s32.totalorder %s29, %s45
      %p47 = scmp.eq.s32.totalorder %s21, 0
      %p48 = por %p46, %p47
      %s50 = sadd.s32 %s49, 1
      %p53 = scmp.eq.s32.totalorder %s15, 1
      %p54 = scmp.ne.s32.totalorder %s49, %s51
      %p55 = scmp.eq.s32.totalorder %s15, 0
      %p56 = por %p54, %p55
      %p57 = scmp.ne.s32.totalorder %s49, %s51
      %p58 = scmp.eq.s32.totalorder %s20, 1
      %p59 = por %p57, %p58
      %p60 = scmp.ne.s32.totalorder %s51, %s52
      %p61 = scmp.eq.s32.totalorder %s20, 0
      %p62 = por %p60, %p61
      %p63 = scmp.ne.s32.totalorder %s51, %s52
      %p64 = scmp.eq.s32.totalorder %s21, 1
      %p65 = por %p63, %p64
      %p67 = scmp.ne.s32.totalorder %s52, %s66
      %p68 = scmp.eq.s32.totalorder %s21, 0
      %p69 = por %p67, %p68
      %s71 = sadd.s32 %s70, 1
      %p74 = scmp.eq.s32.totalorder %s15, 1
      %p75 = scmp.ne.s32.totalorder %s70, %s72
      %p76 = scmp.eq.s32.totalorder %s15, 0
      %p77 = por %p75, %p76
      %p78 = scmp.ne.s32.totalorder %s70, %s72
      %p79 = scmp.eq.s32.totalorder %s20, 1
      %p80 = por %p78, %p79
      %p81 = scmp.ne.s32.totalorder %s72, %s73
      %p82 = scmp.eq.s32.totalorder %s20, 0
      %p83 = por %p81, %p82
      %p84 = scmp.ne.s32.totalorder %s72, %s73
      %p85 = scmp.eq.s32.totalorder %s21, 1
      %p86 = por %p84, %p85
      %p88 = scmp.ne.s32.totalorder %s73, %s87
      %p89 = scmp.eq.s32.totalorder %s21, 0
      %p90 = por %p88, %p89
      %s92 = sadd.s32 %s91, 1
      %p95 = scmp.eq.s32.totalorder %s15, 1
      %p96 = scmp.ne.s32.totalorder %s91, %s93
      %p97 = scmp.eq.s32.totalorder %s15, 0
      %p98 = por %p96, %p97
      %p99 = scmp.ne.s32.totalorder %s91, %s93
      %p100 = scmp.eq.s32.totalorder %s20, 1
      %p101 = por %p99, %p100
      %p102 = scmp.ne.s32.totalorder %s93, %s94
      %p103 = scmp.eq.s32.totalorder %s20, 0
      %p104 = por %p102, %p103
      %p105 = scmp.ne.s32.totalorder %s93, %s94
      %p106 = scmp.eq.s32.totalorder %s21, 1
      %p107 = por %p105, %p106
      %p109 = scmp.ne.s32.totalorder %s94, %s108
      %p110 = scmp.eq.s32.totalorder %s21, 0
      %p111 = por %p109, %p110
      %s113 = sadd.s32 %s112, 1
      %p116 = scmp.eq.s32.totalorder %s15, 1
      %p117 = scmp.ne.s32.totalorder %s112, %s114
      %p118 = scmp.eq.s32.totalorder %s15, 0
      %p119 = por %p117, %p118
      %p120 = scmp.ne.s32.totalorder %s112, %s114
      %p121 = scmp.eq.s32.totalorder %s20, 1
      %p122 = por %p120, %p121
      %p123 = scmp.ne.s32.totalorder %s114, %s115
      %p124 = scmp.eq.s32.totalorder %s20, 0
      %p125 = por %p123, %p124
      %p126 = scmp.ne.s32.totalorder %s114, %s115
      %p127 = scmp.eq.s32.totalorder %s21, 1
      %p128 = por %p126, %p127
      %p130 = scmp.ne.s32.totalorder %s115, %s129
      %p131 = scmp.eq.s32.totalorder %s21, 0
      %p132 = por %p130, %p131
      %s134 = sadd.s32 %s133, 1
      %p137 = scmp.eq.s32.totalorder %s15, 1
      %p138 = scmp.ne.s32.totalorder %s133, %s135
      %p139 = scmp.eq.s32.totalorder %s15, 0
      %p140 = por %p138, %p139
      %p141 = scmp.ne.s32.totalorder %s133, %s135
      %p142 = scmp.eq.s32.totalorder %s20, 1
      %p143 = por %p141, %p142
      %p144 = scmp.ne.s32.totalorder %s135, %s136
      %p145 = scmp.eq.s32.totalorder %s20, 0
      %p146 = por %p144, %p145
      %p147 = scmp.ne.s32.totalorder %s135, %s136
      %p148 = scmp.eq.s32.totalorder %s21, 1
      %p149 = por %p147, %p148
      %p151 = scmp.ne.s32.totalorder %s136, %s150
      %p152 = scmp.eq.s32.totalorder %s21, 0
      %p153 = por %p151, %p152
      %s155 = sadd.s32 %s154, 1
      %p158 = scmp.eq.s32.totalorder %s15, 1
      %p159 = scmp.ne.s32.totalorder %s154, %s156
      %p160 = scmp.eq.s32.totalorder %s15, 0
      %p161 = por %p159, %p160
      %p162 = scmp.ne.s32.totalorder %s154, %s156
      %p163 = scmp.eq.s32.totalorder %s20, 1
      %p164 = por %p162, %p163
      %p165 = scmp.ne.s32.totalorder %s156, %s157
      %p166 = scmp.eq.s32.totalorder %s20, 0
      %p167 = por %p165, %p166
      %p168 = scmp.ne.s32.totalorder %s156, %s157
      %p169 = scmp.eq.s32.totalorder %s21, 1
      %p170 = por %p168, %p169
      %p172 = scmp.ne.s32.totalorder %s157, %s171
      %p173 = scmp.eq.s32.totalorder %s21, 0
      %p174 = por %p172, %p173
      %s175 = ssub.s32 %s15, %s22
      %p176 = scmp.eq.s32.totalorder %s175, 0
      %s178 = sadd.s32 %s177, 1
      %s179 = scalar_select %p176, %s177, %s178
      %p182 = pneg %p176
      %p183 = scmp.eq.s32.totalorder %s15, 1
      %p184 = por %p182, %p183
      %p185 = scmp.ne.s32.totalorder %s177, %s180
      %p186 = scmp.eq.s32.totalorder %s15, 0
      %p187 = por %p185, %p186
      %p188 = scmp.ne.s32.totalorder %s177, %s180
      %p189 = scmp.eq.s32.totalorder %s20, 1
      %p190 = por %p188, %p189
      %p191 = scmp.ne.s32.totalorder %s180, %s181
      %p192 = scmp.eq.s32.totalorder %s20, 0
      %p193 = por %p191, %p192
      %p194 = scmp.ne.s32.totalorder %s180, %s181
      %p195 = scmp.eq.s32.totalorder %s21, 1
      %p196 = por %p194, %p195
      %p198 = scmp.ne.s32.totalorder %s181, %s197
      %p199 = scmp.eq.s32.totalorder %s21, 0
      %p200 = por %p198, %p199
      %p201 = scmp.le.s32.totalorder 1, %s15
      %p202 = scmp.lt.s32.totalorder %s15, 3
      %p203 = pnand %p201, %p202
      %p204 = pneg %p203
      // Predicated region
      $region9: #{tpu_custom_call.1} parent=5 // pred_check
        _
      $region10: #{tpu_custom_call.1} parent=5 // pred_check_branch
        %206 = sbr.rel (%p203) target = $region12
      $region11: #{tpu_custom_call.1} parent=5 // pred_region
        %s207 = ssub.s32 %s15, 1
        // Predicated region
        $region13: #{tpu_custom_call.1} parent=11 // pred_check
          %p208 = pneg %p62
        $region14: #{tpu_custom_call.1} parent=11 // pred_check_branch
          %210 = sbr.rel (%p208) target = $region16
        $region15: #{tpu_custom_call.1} parent=11 // pred_region
          _
        $region16: #{tpu_custom_call.1} parent=11 // pred_fallthru
          _
        // Predicated region
        $region17: #{tpu_custom_call.1} parent=11 // pred_check
          %p211 = pneg %p83
        $region18: #{tpu_custom_call.1} parent=11 // pred_check_branch
          %213 = sbr.rel (%p211) target = $region20
        $region19: #{tpu_custom_call.1} parent=11 // pred_region
          _
        $region20: #{tpu_custom_call.1} parent=11 // pred_fallthru
          _
        // Predicated region
        $region21: #{tpu_custom_call.1} parent=11 // pred_check
          %p214 = pneg %p104
        $region22: #{tpu_custom_call.1} parent=11 // pred_check_branch
          %216 = sbr.rel (%p214) target = $region24
        $region23: #{tpu_custom_call.1} parent=11 // pred_region
          %s218 = ssub.s32 2048, 2048
          %219 = vsyncadd [#allocation3], %s218
          %s220 = sshll.u32 [#allocation2], 4
          %s221 = int_to_ptr.vmem [resolvable:$true] %s220
          %226 = dma.hbm_to_vmem [thread:$0]  %s3, 2048, %s221, [#allocation3], 128, 128, 8
        $region24: #{tpu_custom_call.1} parent=11 // pred_fallthru
          _
        // Predicated region
        $region25: #{tpu_custom_call.1} parent=11 // pred_check
          %p227 = pneg %p125
        $region26: #{tpu_custom_call.1} parent=11 // pred_check_branch
          %229 = sbr.rel (%p227) target = $region28
        $region27: #{tpu_custom_call.1} parent=11 // pred_region
          _
        $region28: #{tpu_custom_call.1} parent=11 // pred_fallthru
          _
        // Predicated region
        $region29: #{tpu_custom_call.1} parent=11 // pred_check
          %p230 = pneg %p146
        $region30: #{tpu_custom_call.1} parent=11 // pred_check_branch
          %232 = sbr.rel (%p230) target = $region32
        $region31: #{tpu_custom_call.1} parent=11 // pred_region
          %s234 = ssub.s32 2048, 2048
          %235 = vsyncadd [#allocation5], %s234
          %s236 = sshll.u32 [#allocation4], 4
          %s237 = int_to_ptr.vmem [resolvable:$true] %s236
          %242 = dma.hbm_to_vmem [thread:$0]  %s5, 2048, %s237, [#allocation5], 128, 128, 8
        $region32: #{tpu_custom_call.1} parent=11 // pred_fallthru
          _
        // Predicated region
        $region33: #{tpu_custom_call.1} parent=11 // pred_check
          %p243 = pneg %p167
        $region34: #{tpu_custom_call.1} parent=11 // pred_check_branch
          %245 = sbr.rel (%p243) target = $region36
        $region35: #{tpu_custom_call.1} parent=11 // pred_region
          _
        $region36: #{tpu_custom_call.1} parent=11 // pred_fallthru
          _
      $region12: #{tpu_custom_call.1} parent=5 // pred_fallthru
        _
      %p246 = scmp.lt.s32.totalorder %s15, 2
      // Predicated region
      $region37: #{tpu_custom_call.1} parent=5 // pred_check
        %p247 = pneg %p246
      $region38: #{tpu_custom_call.1} parent=5 // pred_check_branch
        %249 = sbr.rel (%p247) target = $region40
      $region39: #{tpu_custom_call.1} parent=5 // pred_region
        // Predicated region
        $region41: #{tpu_custom_call.1} parent=39 // pred_check
          %p250 = pneg %p35
        $region42: #{tpu_custom_call.1} parent=39 // pred_check_branch
          %252 = sbr.rel (%p250) target = $region44
        $region43: #{tpu_custom_call.1} parent=39 // pred_region
          %s253 = smul.u32 4, %s15
          %p254 = scmp.lt.s32.totalorder %s253, 7
          %s255 = scalar_select %p254, %s253, 7
          %s256 = smul.addr %s255, 8
          %s257 = scalar_lea.vmem %s0, %s256
          %s258 = smul.u32 4, %s15
        $region44: #{tpu_custom_call.1} parent=39 // pred_fallthru
          _
      $region40: #{tpu_custom_call.1} parent=5 // pred_fallthru
        _
      %p259 = scmp.le.s32.totalorder 1, %s15
      %p260 = scmp.lt.s32.totalorder %s15, 3
      %p261 = pnand %p259, %p260
      %p262 = pneg %p261
      // Predicated region
      $region45: #{tpu_custom_call.1} parent=5 // pred_check
        _
      $region46: #{tpu_custom_call.1} parent=5 // pred_check_branch
        %264 = sbr.rel (%p261) target = $region48
      $region47: #{tpu_custom_call.1} parent=5 // pred_region
        %s265 = ssub.s32 %s15, 1
        // Predicated region
        $region49: #{tpu_custom_call.1} parent=47 // pred_check
          %p266 = pneg %p104
        $region50: #{tpu_custom_call.1} parent=47 // pred_check_branch
          %268 = sbr.rel (%p266) target = $region52
        $region51: #{tpu_custom_call.1} parent=47 // pred_region
          %269 = dma.done [#allocation3], 2048
        $region52: #{tpu_custom_call.1} parent=47 // pred_fallthru
          _
        // Predicated region
        $region53: #{tpu_custom_call.1} parent=47 // pred_check
          %p270 = pneg %p146
        $region54: #{tpu_custom_call.1} parent=47 // pred_check_branch
          %272 = sbr.rel (%p270) target = $region56
        $region55: #{tpu_custom_call.1} parent=47 // pred_region
          %273 = dma.done [#allocation5], 2048
        $region56: #{tpu_custom_call.1} parent=47 // pred_fallthru
          _
        %s274 = smul.u32 4, %s20
        %p275 = scmp.lt.s32.totalorder %s274, 7
        %s276 = scalar_select %p275, %s274, 7
        %s277 = smul.addr %s276, 8
        %s278 = scalar_lea.vmem %s0, %s277
        %p279 = pneg %p41
        %p280 = pneg %p38
        %p281 = pneg %p62
        %p282 = pneg %p59
        %p283 = pneg %p83
        %p284 = pneg %p80
        %p285 = pneg %p104
        %p286 = pneg %p101
        %p287 = pneg %p125
        %p288 = pneg %p122
        %p289 = pneg %p146
        %p290 = pneg %p143
        %p291 = pneg %p167
        %p292 = pneg %p164
        %p293 = pneg %p193
        %p294 = pneg %p190
        %s295 = smul.u32 4, %s20
        %p296 = scmp.lt.s32.totalorder %s295, 7
        %s297 = scalar_select %p296, %s295, 7
        %s298 = smul.addr %s297, 8
        %s299 = scalar_lea.vmem %s7, %s298
        %s300 = smul.u32 4, %s20
        %p301 = scmp.lt.s32.totalorder %s300, 7
        %s302 = scalar_select %p301, %s300, 7
        %s303 = smul.addr %s302, 8
        %s304 = scalar_lea.vmem %s0, %s303
        %s305 = smul.u32 4, %s20
        %s306 = smul.u32 4, %s20
        %p307 = scmp.lt.s32.totalorder %s306, 7
        %s308 = scalar_select %p307, %s306, 7
        %s309 = smul.addr %s308, 8
        %s310 = scalar_lea.vmem %s7, %s309
        %s311 = smul.u32 4, %s20
        %v312 = vld [vmem:[%s304] sm:$0xff]
        %v313 = vld [vmem:[%s304 + $0x8] sm:$0xff]
        %v314 = vld [vmem:[%s304 + $0x10] sm:$0xff]
        %v315 = vld [vmem:[%s304 + $0x18] sm:$0xff]
        %v316 = vld [vmem:[%s1] sm:$0x1]
        %v317 = vld [vmem:[%s2] sm:$0x1]
        %319 = vset.pattern.permute.xlu0 0
        %320 = vperm.xlu0 %319, %v312
        %v321 = vpop.permute.xlu0 %320
        %324 = vset.pattern.permute.xlu0 0
        %325 = vperm.xlu0 %324, %v313
        %v326 = vpop.permute.xlu0 %325
        %329 = vset.pattern.permute.xlu0 0
        %330 = vperm.xlu0 %329, %v314
        %v331 = vpop.permute.xlu0 %330
        %334 = vset.pattern.permute.xlu0 0
        %335 = vperm.xlu0 %334, %v315
        %v336 = vpop.permute.xlu0 %335
        %v339 = vlaneseq
        %v340 = vshrl.u32 %v339, 7
        %v341 = vsub.s32 0, %v340
        %v342 = vrot.slane %v316, %v341
        %v344 = vmul.f32 %v321, %v342
        %v345 = vmul.f32 %v326, %v342
        %v346 = vmul.f32 %v331, %v342
        %v347 = vmul.f32 %v336, %v342
        %v349 = vlaneseq
        %v350 = vshrl.u32 %v349, 7
        %v351 = vsub.s32 0, %v350
        %v352 = vrot.slane %v317, %v351
        %v354 = vadd.f32 %v344, %v352
        %v355 = vadd.f32 %v345, %v352
        %v356 = vadd.f32 %v346, %v352
        %v357 = vadd.f32 %v347, %v352
        %v358 = vtanh.pop %v354
        %v359 = vtanh.pop %v355
        %v360 = vtanh.pop %v356
        %v361 = vtanh.pop %v357
        %v362 = vld [vmem:[#allocation2] sm:$0xff]
        %v363 = vld [vmem:[#allocation2 + $0x8] sm:$0xff]
        %v364 = vld [vmem:[#allocation2 + $0x10] sm:$0xff]
        %v365 = vld [vmem:[#allocation2 + $0x18] sm:$0xff]
        %v366 = vld [vmem:[#allocation2 + $0x20] sm:$0xff]
        %v367 = vld [vmem:[#allocation2 + $0x28] sm:$0xff]
        %v368 = vld [vmem:[#allocation2 + $0x30] sm:$0xff]
        %v369 = vld [vmem:[#allocation2 + $0x38] sm:$0xff]
        %v370 = vld [vmem:[#allocation2 + $0x40] sm:$0xff]
        %v371 = vld [vmem:[#allocation2 + $0x48] sm:$0xff]
        %v372 = vld [vmem:[#allocation2 + $0x50] sm:$0xff]
        %v373 = vld [vmem:[#allocation2 + $0x58] sm:$0xff]
        %v374 = vld [vmem:[#allocation2 + $0x60] sm:$0xff]
        %v375 = vld [vmem:[#allocation2 + $0x68] sm:$0xff]
        %v376 = vld [vmem:[#allocation2 + $0x70] sm:$0xff]
        %v377 = vld [vmem:[#allocation2 + $0x78] sm:$0xff]
        %v378 = vld [vmem:[%s4] sm:$0x1]
        %v380 = vlaneseq
        %v381 = vshrl.u32 %v380, 7
        %v382 = vsub.s32 0, %v381
        %v383 = vrot.slane %v378, %v382
        %385 = vmatprep.subr.mxu0 0.0
        %386 = vmatpush1.msra.mxu0 %v362
        %387 = vmatprep.subr.mxu0 0.0
        %388 = vmatpush1.msra.mxu0 %v363
        %389 = vmatprep.subr.mxu0 0.0
        %390 = vmatpush1.msra.mxu0 %v364
        %391 = vmatprep.subr.mxu0 0.0
        %392 = vmatpush1.msra.mxu0 %v365
        %393 = vmatprep.subr.mxu0 0.0
        %394 = vmatpush1.msra.mxu0 %v366
        %395 = vmatprep.subr.mxu0 0.0
        %396 = vmatpush1.msra.mxu0 %v367
        %397 = vmatprep.subr.mxu0 0.0
        %398 = vmatpush1.msra.mxu0 %v368
        %399 = vmatprep.subr.mxu0 0.0
        %400 = vmatpush1.msra.mxu0 %v369
        %401 = vmatprep.subr.mxu0 0.0
        %402 = vmatpush1.msra.mxu0 %v370
        %403 = vmatprep.subr.mxu0 0.0
        %404 = vmatpush1.msra.mxu0 %v371
        %405 = vmatprep.subr.mxu0 0.0
        %406 = vmatpush1.msra.mxu0 %v372
        %407 = vmatprep.subr.mxu0 0.0
        %408 = vmatpush1.msra.mxu0 %v373
        %409 = vmatprep.subr.mxu0 0.0
        %410 = vmatpush1.msra.mxu0 %v374
        %411 = vmatprep.subr.mxu0 0.0
        %412 = vmatpush1.msra.mxu0 %v375
        %413 = vmatprep.subr.mxu0 0.0
        %414 = vmatpush1.msra.mxu0 %v376
        %415 = vmatprep.subr.mxu0 0.0
        %416 = vmatpush1.msra.mxu0 %v377
        %417 = vmatprep.subr.mxu0 0.0
        %418 = vmatpush1.msra.mxu0 0.0
        %419 = vmatprep.subr.mxu0 0.0
        %420 = vmatpush1.msra.mxu0 0.0
        %421 = vmatprep.subr.mxu0 0.0
        %422 = vmatpush1.msra.mxu0 0.0
        %423 = vmatprep.subr.mxu0 0.0
        %424 = vmatpush1.msra.mxu0 0.0
        %425 = vmatprep.subr.mxu0 0.0
        %426 = vmatpush1.msra.mxu0 0.0
        %427 = vmatprep.subr.mxu0 0.0
        %428 = vmatpush1.msra.mxu0 0.0
        %429 = vmatprep.subr.mxu0 0.0
        %430 = vmatpush1.msra.mxu0 0.0
        %431 = vmatprep.subr.mxu0 0.0
        %432 = vmatpush1.msra.mxu0 0.0
        %433 = vmatprep.subr.mxu0 0.0
        %434 = vmatpush1.msra.mxu0 0.0
        %435 = vmatprep.subr.mxu0 0.0
        %436 = vmatpush1.msra.mxu0 0.0
        %437 = vmatprep.subr.mxu0 0.0
        %438 = vmatpush1.msra.mxu0 0.0
        %439 = vmatprep.subr.mxu0 0.0
        %440 = vmatpush1.msra.mxu0 0.0
        %441 = vmatprep.subr.mxu0 0.0
        %442 = vmatpush1.msra.mxu0 0.0
        %443 = vmatprep.subr.mxu0 0.0
        %444 = vmatpush1.msra.mxu0 0.0
        %445 = vmatprep.subr.mxu0 0.0
        %446 = vmatpush1.msra.mxu0 0.0
        %447 = vmatprep.subr.mxu0 0.0
        %448 = vmatpush1.msra.mxu0 0.0
        %449 = vmatprep.mubr.f32.mxu0 0.0
        %450 = vmatmul.mubr.f32.gmra.mrb[0].mxu0 %v358
        %v451 = vpop.f32.mrb[0].mxu0
        %v452 = vadd.f32 %v383, %v451
        %v453 = vpop.f32.mrb[0].mxu0
        %454 = vmatprep.mubr.f32.mxu0 0.0
        %455 = vmatmul.mubr.f32.gmra.mrb[0].mxu0 %v359
        %v456 = vpop.f32.mrb[0].mxu0
        %v457 = vadd.f32 %v383, %v456
        %v458 = vpop.f32.mrb[0].mxu0
        %459 = vmatprep.mubr.f32.mxu0 0.0
        %460 = vmatmul.mubr.f32.gmra.mrb[0].mxu0 %v360
        %v461 = vpop.f32.mrb[0].mxu0
        %v462 = vadd.f32 %v383, %v461
        %v463 = vpop.f32.mrb[0].mxu0
        %464 = vmatprep.mubr.f32.mxu0 0.0
        %465 = vmatmul.mubr.f32.gmra.mrb[0].mxu0 %v361
        %v466 = vpop.f32.mrb[0].mxu0
        %v467 = vadd.f32 %v383, %v466
        %v468 = vpop.f32.mrb[0].mxu0
        %469 = vdwg.mxu0
        %v470 = vtanh.pop %v452
        %v471 = vtanh.pop %v457
        %v472 = vtanh.pop %v462
        %v473 = vtanh.pop %v467
        %v474 = vld [vmem:[#allocation4] sm:$0xff]
        %v475 = vld [vmem:[#allocation4 + $0x8] sm:$0xff]
        %v476 = vld [vmem:[#allocation4 + $0x10] sm:$0xff]
        %v477 = vld [vmem:[#allocation4 + $0x18] sm:$0xff]
        %v478 = vld [vmem:[#allocation4 + $0x20] sm:$0xff]
        %v479 = vld [vmem:[#allocation4 + $0x28] sm:$0xff]
        %v480 = vld [vmem:[#allocation4 + $0x30] sm:$0xff]
        %v481 = vld [vmem:[#allocation4 + $0x38] sm:$0xff]
        %v482 = vld [vmem:[#allocation4 + $0x40] sm:$0xff]
        %v483 = vld [vmem:[#allocation4 + $0x48] sm:$0xff]
        %v484 = vld [vmem:[#allocation4 + $0x50] sm:$0xff]
        %v485 = vld [vmem:[#allocation4 + $0x58] sm:$0xff]
        %v486 = vld [vmem:[#allocation4 + $0x60] sm:$0xff]
        %v487 = vld [vmem:[#allocation4 + $0x68] sm:$0xff]
        %v488 = vld [vmem:[#allocation4 + $0x70] sm:$0xff]
        %v489 = vld [vmem:[#allocation4 + $0x78] sm:$0xff]
        %v490 = vld [vmem:[%s6] sm:$0x1]
        %v492 = vlaneseq
        %v493 = vshrl.u32 %v492, 7
        %v494 = vsub.s32 0, %v493
        %v495 = vrot.slane %v490, %v494
        %497 = vmatprep.subr.mxu0 0.0
        %498 = vmatpush1.msra.mxu0 %v474
        %499 = vmatprep.subr.mxu0 0.0
        %500 = vmatpush1.msra.mxu0 %v475
        %501 = vmatprep.subr.mxu0 0.0
        %502 = vmatpush1.msra.mxu0 %v476
        %503 = vmatprep.subr.mxu0 0.0
        %504 = vmatpush1.msra.mxu0 %v477
        %505 = vmatprep.subr.mxu0 0.0
        %506 = vmatpush1.msra.mxu0 %v478
        %507 = vmatprep.subr.mxu0 0.0
        %508 = vmatpush1.msra.mxu0 %v479
        %509 = vmatprep.subr.mxu0 0.0
        %510 = vmatpush1.msra.mxu0 %v480
        %511 = vmatprep.subr.mxu0 0.0
        %512 = vmatpush1.msra.mxu0 %v481
        %513 = vmatprep.subr.mxu0 0.0
        %514 = vmatpush1.msra.mxu0 %v482
        %515 = vmatprep.subr.mxu0 0.0
        %516 = vmatpush1.msra.mxu0 %v483
        %517 = vmatprep.subr.mxu0 0.0
        %518 = vmatpush1.msra.mxu0 %v484
        %519 = vmatprep.subr.mxu0 0.0
        %520 = vmatpush1.msra.mxu0 %v485
        %521 = vmatprep.subr.mxu0 0.0
        %522 = vmatpush1.msra.mxu0 %v486
        %523 = vmatprep.subr.mxu0 0.0
        %524 = vmatpush1.msra.mxu0 %v487
        %525 = vmatprep.subr.mxu0 0.0
        %526 = vmatpush1.msra.mxu0 %v488
        %527 = vmatprep.subr.mxu0 0.0
        %528 = vmatpush1.msra.mxu0 %v489
        %529 = vmatprep.subr.mxu0 0.0
        %530 = vmatpush1.msra.mxu0 0.0
        %531 = vmatprep.subr.mxu0 0.0
        %532 = vmatpush1.msra.mxu0 0.0
        %533 = vmatprep.subr.mxu0 0.0
        %534 = vmatpush1.msra.mxu0 0.0
        %535 = vmatprep.subr.mxu0 0.0
        %536 = vmatpush1.msra.mxu0 0.0
        %537 = vmatprep.subr.mxu0 0.0
        %538 = vmatpush1.msra.mxu0 0.0
        %539 = vmatprep.subr.mxu0 0.0
        %540 = vmatpush1.msra.mxu0 0.0
        %541 = vmatprep.subr.mxu0 0.0
        %542 = vmatpush1.msra.mxu0 0.0
        %543 = vmatprep.subr.mxu0 0.0
        %544 = vmatpush1.msra.mxu0 0.0
        %545 = vmatprep.subr.mxu0 0.0
        %546 = vmatpush1.msra.mxu0 0.0
        %547 = vmatprep.subr.mxu0 0.0
        %548 = vmatpush1.msra.mxu0 0.0
        %549 = vmatprep.subr.mxu0 0.0
        %550 = vmatpush1.msra.mxu0 0.0
        %551 = vmatprep.subr.mxu0 0.0
        %552 = vmatpush1.msra.mxu0 0.0
        %553 = vmatprep.subr.mxu0 0.0
        %554 = vmatpush1.msra.mxu0 0.0
        %555 = vmatprep.subr.mxu0 0.0
        %556 = vmatpush1.msra.mxu0 0.0
        %557 = vmatprep.subr.mxu0 0.0
        %558 = vmatpush1.msra.mxu0 0.0
        %559 = vmatprep.subr.mxu0 0.0
        %560 = vmatpush1.msra.mxu0 0.0
        %561 = vmatprep.mubr.f32.mxu0 0.0
        %562 = vmatmul.mubr.f32.gmra.mrb[0].mxu0 %v470
        %v563 = vpop.f32.mrb[0].mxu0
        %v564 = vadd.f32 %v495, %v563
        %v565 = vpop.f32.mrb[0].mxu0
        %566 = vmatprep.mubr.f32.mxu0 0.0
        %567 = vmatmul.mubr.f32.gmra.mrb[0].mxu0 %v471
        %v568 = vpop.f32.mrb[0].mxu0
        %v569 = vadd.f32 %v495, %v568
        %v570 = vpop.f32.mrb[0].mxu0
        %571 = vmatprep.mubr.f32.mxu0 0.0
        %572 = vmatmul.mubr.f32.gmra.mrb[0].mxu0 %v472
        %v573 = vpop.f32.mrb[0].mxu0
        %v574 = vadd.f32 %v495, %v573
        %v575 = vpop.f32.mrb[0].mxu0
        %576 = vmatprep.mubr.f32.mxu0 0.0
        %577 = vmatmul.mubr.f32.gmra.mrb[0].mxu0 %v473
        %v578 = vpop.f32.mrb[0].mxu0
        %v579 = vadd.f32 %v495, %v578
        %v580 = vpop.f32.mrb[0].mxu0
        %581 = vdwg.mxu0
        %vm582 = vcmask 7168
        %583 = vst.msk [vmem:[%s310] sm:$0xff] %vm582, %v564
        %584 = vst.msk [vmem:[%s310 + $0x8] sm:$0xff] %vm582, %v569
        %585 = vst.msk [vmem:[%s310 + $0x10] sm:$0xff] %vm582, %v574
        %586 = vst.msk [vmem:[%s310 + $0x18] sm:$0xff] %vm582, %v579
        %s587 = smul.u32 4, %s20
        %p588 = scmp.lt.s32.totalorder %s587, 7
        %s589 = scalar_select %p588, %s587, 7
        %s590 = smul.addr %s589, 8
        %s591 = scalar_lea.vmem %s7, %s590
        // Predicated region
        $region57: #{tpu_custom_call.1} parent=47 // pred_check
          %p592 = pneg %p190
        $region58: #{tpu_custom_call.1} parent=47 // pred_check_branch
          %594 = sbr.rel (%p592) target = $region60
        $region59: #{tpu_custom_call.1} parent=47 // pred_region
          %s595 = smul.u32 4, %s20
        $region60: #{tpu_custom_call.1} parent=47 // pred_fallthru
          _
      $region48: #{tpu_custom_call.1} parent=5 // pred_fallthru
        _
      %p596 = scmp.le.s32.totalorder 2, %s15
      // Predicated region
      $region61: #{tpu_custom_call.1} parent=5 // pred_check
        %p597 = pneg %p596
      $region62: #{tpu_custom_call.1} parent=5 // pred_check_branch
        %599 = sbr.rel (%p597) target = $region64
      $region63: #{tpu_custom_call.1} parent=5 // pred_region
        %s600 = ssub.s32 %s15, 2
        // Predicated region
        $region65: #{tpu_custom_call.1} parent=63 // pred_check
          %p601 = pneg %p196
        $region66: #{tpu_custom_call.1} parent=63 // pred_check_branch
          %603 = sbr.rel (%p601) target = $region68
        $region67: #{tpu_custom_call.1} parent=63 // pred_region
          %s604 = smul.u32 4, %s21
          %p605 = scmp.lt.s32.totalorder %s604, 7
          %s606 = scalar_select %p605, %s604, 7
          %s607 = smul.addr %s606, 8
          %s608 = scalar_lea.vmem %s7, %s607
        $region68: #{tpu_custom_call.1} parent=63 // pred_fallthru
          _
      $region64: #{tpu_custom_call.1} parent=5 // pred_fallthru
        _
    $region6: #{tpu_custom_call.1} parent=1 // loop_footer
      %s19 = sadd.s32 1, %s15
    $region7: #{tpu_custom_call.1} parent=1 // loop_footer_branch
      %14 = sbr.rel target = $region3
    $region8: #{tpu_custom_call.1} parent=1 // loop_exit
      _
    %609 = vsyncpa [#allocation3], 1
    %s610 = scalar_lea.sflag [#allocation3], 1
    %611 = vsyncpa %s610, 1
    %612 = vsyncpa [#allocation5], 1

// kernel: tpu_custom_call.1
$region0: #{tpu_custom_call.1}
  #allocation0 [shape = 'u32[]', space=smem, size = 0x4, offset = 0x4, fixed_abs, tag = 'smem constant byte address 0x4 - core index']
  #allocation1 [shape = 'u32[144,128]{1,0:T(1,128)}', space=vmem, size = 0x12000, scoped, tag = 'internal scratch']
  %s0 = inlined_call_operand.vmem [shape: f32[64,1], index: 0, kind: input, shape index: {}]
  %s1 = inlined_call_operand.vmem [shape: f32[1,128], index: 1, kind: input, shape index: {}]
  %s2 = inlined_call_operand.vmem [shape: f32[1,128], index: 2, kind: input, shape index: {}]
  %s3 = inlined_call_operand.hbm [shape: f32[128,128], index: 3, kind: input, shape index: {}]
  %s4 = inlined_call_operand.vmem [shape: f32[1,128], index: 4, kind: input, shape index: {}]
  %s5 = inlined_call_operand.hbm [shape: f32[128,128], index: 5, kind: input, shape index: {}]
  %s6 = inlined_call_operand.vmem [shape: f32[1,128], index: 6, kind: input, shape index: {}]
  %s7 = inlined_call_operand.vmem [shape: f32[64,1], index: 7, kind: output, shape index: {}]
  %s8 = sld [smem:[#allocation0]]
  $region69: #{tpu_custom_call.1} parent=0
    _
  %s10 = ssub.s32 1, %s8
  %s11 = scalar_select 0, %s10, %s8
  $region1: #{tpu_custom_call.1} parent=0
    #allocation2 [shape = 'u8[65536]{0}', space=vmem, size = 0x10000, scoped, tag = 'input window, operand 3, single buffered']
    #allocation3 [shape = 's32[2]{0}', space=sflag, size = 0x8, scoped, tag = 'scoped memory for tpu_custom_call.1']
    #allocation4 [shape = 'u8[65536]{0}', space=vmem, size = 0x10000, scoped, tag = 'input window, operand 5, single buffered']
    #allocation5 [shape = 's32[1]{0}', space=sflag, size = 0x4, scoped, tag = 'scoped memory for tpu_custom_call.1']
    %12 = vsyncpa [#allocation3], 0
    %13 = vsyncpa [#allocation5], 0
    loop: start=0, step=1, limit=4
    $region2: #{tpu_custom_call.1} parent=1 // loop_pre_header
      _
    $region3: #{tpu_custom_call.1} parent=1 // loop_header
      %s15 = sphi 0, %s19
      %p16 = scmp.ge.s32.totalorder %s15, 4
      %s25 = sphi 0, %s27
      %s28 = sphi 0, %s25
      %s29 = sphi 0, %s28
      %s45 = sphi 0, %s29
      %s49 = sphi 0, %s49
      %s51 = sphi 0, %s49
      %s52 = sphi 0, %s51
      %s66 = sphi 0, %s52
      %s70 = sphi 0, %s70
      %s72 = sphi 0, %s70
      %s73 = sphi 0, %s72
      %s87 = sphi 0, %s73
      %s91 = sphi 0, %s91
      %s93 = sphi 0, %s91
      %s94 = sphi 0, %s93
      %s108 = sphi 0, %s94
      %s112 = sphi 0, %s112
      %s114 = sphi 0, %s112
      %s115 = sphi 0, %s114
      %s129 = sphi 0, %s115
      %s133 = sphi 0, %s133
      %s135 = sphi 0, %s133
      %s136 = sphi 0, %s135
      %s150 = sphi 0, %s136
      %s154 = sphi 0, %s154
      %s156 = sphi 0, %s154
      %s157 = sphi 0, %s156
      %s171 = sphi 0, %s157
      %s177 = sphi 0, %s179
      %s180 = sphi 0, %s177
      %s181 = sphi 0, %s180
      %s197 = sphi 0, %s181
    $region4: #{tpu_custom_call.1} parent=1 // loop_header_branch
      %18 = sbr.rel (%p16) target = $region8
    $region5: #{tpu_custom_call.1} parent=1 // loop_body
      %s20 = ssub.s32 %s15, 1
      %s21 = ssub.s32 %s15, 2
      %s22 = sadd.s32 %s15, 1
      %s23 = ssub.s32 %s15, %s22
      %p24 = scmp.eq.s32.totalorder %s23, 0
      %s26 = sadd.s32 %s25, 1
      %s27 = scalar_select %p24, %s25, %s26
      %p30 = pneg %p24
      %p31 = scmp.eq.s32.totalorder %s15, 1
      %p32 = por %p30, %p31
      %p33 = scmp.ne.s32.totalorder %s25, %s28
      %p34 = scmp.eq.s32.totalorder %s15, 0
      %p35 = por %p33, %p34
      %p36 = scmp.ne.s32.totalorder %s25, %s28
      %p37 = scmp.eq.s32.totalorder %s20, 1
      %p38 = por %p36, %p37
      %p39 = scmp.ne.s32.totalorder %s28, %s29
      %p40 = scmp.eq.s32.totalorder %s20, 0
      %p41 = por %p39, %p40
      %p42 = scmp.ne.s32.totalorder %s28, %s29
      %p43 = scmp.eq.s32.totalorder %s21, 1
      %p44 = por %p42, %p43
      %p46 = scmp.ne.s32.totalorder %s29, %s45
      %p47 = scmp.eq.s32.totalorder %s21, 0
      %p48 = por %p46, %p47
      %s50 = sadd.s32 %s49, 1
      %p53 = scmp.eq.s32.totalorder %s15, 1
      %p54 = scmp.ne.s32.totalorder %s49, %s51
      %p55 = scmp.eq.s32.totalorder %s15, 0
      %p56 = por %p54, %p55
      %p57 = scmp.ne.s32.totalorder %s49, %s51
      %p58 = scmp.eq.s32.totalorder %s20, 1
      %p59 = por %p57, %p58
      %p60 = scmp.ne.s32.totalorder %s51, %s52
      %p61 = scmp.eq.s32.totalorder %s20, 0
      %p62 = por %p60, %p61
      %p63 = scmp.ne.s32.totalorder %s51, %s52
      %p64 = scmp.eq.s32.totalorder %s21, 1
      %p65 = por %p63, %p64
      %p67 = scmp.ne.s32.totalorder %s52, %s66
      %p68 = scmp.eq.s32.totalorder %s21, 0
      %p69 = por %p67, %p68
      %s71 = sadd.s32 %s70, 1
      %p74 = scmp.eq.s32.totalorder %s15, 1
      %p75 = scmp.ne.s32.totalorder %s70, %s72
      %p76 = scmp.eq.s32.totalorder %s15, 0
      %p77 = por %p75, %p76
      %p78 = scmp.ne.s32.totalorder %s70, %s72
      %p79 = scmp.eq.s32.totalorder %s20, 1
      %p80 = por %p78, %p79
      %p81 = scmp.ne.s32.totalorder %s72, %s73
      %p82 = scmp.eq.s32.totalorder %s20, 0
      %p83 = por %p81, %p82
      %p84 = scmp.ne.s32.totalorder %s72, %s73
      %p85 = scmp.eq.s32.totalorder %s21, 1
      %p86 = por %p84, %p85
      %p88 = scmp.ne.s32.totalorder %s73, %s87
      %p89 = scmp.eq.s32.totalorder %s21, 0
      %p90 = por %p88, %p89
      %s92 = sadd.s32 %s91, 1
      %p95 = scmp.eq.s32.totalorder %s15, 1
      %p96 = scmp.ne.s32.totalorder %s91, %s93
      %p97 = scmp.eq.s32.totalorder %s15, 0
      %p98 = por %p96, %p97
      %p99 = scmp.ne.s32.totalorder %s91, %s93
      %p100 = scmp.eq.s32.totalorder %s20, 1
      %p101 = por %p99, %p100
      %p102 = scmp.ne.s32.totalorder %s93, %s94
      %p103 = scmp.eq.s32.totalorder %s20, 0
      %p104 = por %p102, %p103
      %p105 = scmp.ne.s32.totalorder %s93, %s94
      %p106 = scmp.eq.s32.totalorder %s21, 1
      %p107 = por %p105, %p106
      %p109 = scmp.ne.s32.totalorder %s94, %s108
      %p110 = scmp.eq.s32.totalorder %s21, 0
      %p111 = por %p109, %p110
      %s113 = sadd.s32 %s112, 1
      %p116 = scmp.eq.s32.totalorder %s15, 1
      %p117 = scmp.ne.s32.totalorder %s112, %s114
      %p118 = scmp.eq.s32.totalorder %s15, 0
      %p119 = por %p117, %p118
      %p120 = scmp.ne.s32.totalorder %s112, %s114
      %p121 = scmp.eq.s32.totalorder %s20, 1
      %p122 = por %p120, %p121
      %p123 = scmp.ne.s32.totalorder %s114, %s115
      %p124 = scmp.eq.s32.totalorder %s20, 0
      %p125 = por %p123, %p124
      %p126 = scmp.ne.s32.totalorder %s114, %s115
      %p127 = scmp.eq.s32.totalorder %s21, 1
      %p128 = por %p126, %p127
      %p130 = scmp.ne.s32.totalorder %s115, %s129
      %p131 = scmp.eq.s32.totalorder %s21, 0
      %p132 = por %p130, %p131
      %s134 = sadd.s32 %s133, 1
      %p137 = scmp.eq.s32.totalorder %s15, 1
      %p138 = scmp.ne.s32.totalorder %s133, %s135
      %p139 = scmp.eq.s32.totalorder %s15, 0
      %p140 = por %p138, %p139
      %p141 = scmp.ne.s32.totalorder %s133, %s135
      %p142 = scmp.eq.s32.totalorder %s20, 1
      %p143 = por %p141, %p142
      %p144 = scmp.ne.s32.totalorder %s135, %s136
      %p145 = scmp.eq.s32.totalorder %s20, 0
      %p146 = por %p144, %p145
      %p147 = scmp.ne.s32.totalorder %s135, %s136
      %p148 = scmp.eq.s32.totalorder %s21, 1
      %p149 = por %p147, %p148
      %p151 = scmp.ne.s32.totalorder %s136, %s150
      %p152 = scmp.eq.s32.totalorder %s21, 0
      %p153 = por %p151, %p152
      %s155 = sadd.s32 %s154, 1
      %p158 = scmp.eq.s32.totalorder %s15, 1
      %p159 = scmp.ne.s32.totalorder %s154, %s156
      %p160 = scmp.eq.s32.totalorder %s15, 0
      %p161 = por %p159, %p160
      %p162 = scmp.ne.s32.totalorder %s154, %s156
      %p163 = scmp.eq.s32.totalorder %s20, 1
      %p164 = por %p162, %p163
      %p165 = scmp.ne.s32.totalorder %s156, %s157
      %p166 = scmp.eq.s32.totalorder %s20, 0
      %p167 = por %p165, %p166
      %p168 = scmp.ne.s32.totalorder %s156, %s157
      %p169 = scmp.eq.s32.totalorder %s21, 1
      %p170 = por %p168, %p169
      %p172 = scmp.ne.s32.totalorder %s157, %s171
      %p173 = scmp.eq.s32.totalorder %s21, 0
      %p174 = por %p172, %p173
      %s175 = ssub.s32 %s15, %s22
      %p176 = scmp.eq.s32.totalorder %s175, 0
      %s178 = sadd.s32 %s177, 1
      %s179 = scalar_select %p176, %s177, %s178
      %p182 = pneg %p176
      %p183 = scmp.eq.s32.totalorder %s15, 1
      %p184 = por %p182, %p183
      %p185 = scmp.ne.s32.totalorder %s177, %s180
      %p186 = scmp.eq.s32.totalorder %s15, 0
      %p187 = por %p185, %p186
      %p188 = scmp.ne.s32.totalorder %s177, %s180
      %p189 = scmp.eq.s32.totalorder %s20, 1
      %p190 = por %p188, %p189
      %p191 = scmp.ne.s32.totalorder %s180, %s181
      %p192 = scmp.eq.s32.totalorder %s20, 0
      %p193 = por %p191, %p192
      %p194 = scmp.ne.s32.totalorder %s180, %s181
      %p195 = scmp.eq.s32.totalorder %s21, 1
      %p196 = por %p194, %p195
      %p198 = scmp.ne.s32.totalorder %s181, %s197
      %p199 = scmp.eq.s32.totalorder %s21, 0
      %p200 = por %p198, %p199
      %p201 = scmp.le.s32.totalorder 1, %s15
      %p202 = scmp.lt.s32.totalorder %s15, 3
      %p203 = pnand %p201, %p202
      %p204 = pneg %p203
      // Predicated region
      $region9: #{tpu_custom_call.1} parent=5 // pred_check
        _
      $region10: #{tpu_custom_call.1} parent=5 // pred_check_branch
        %206 = sbr.rel (%p203) target = $region12
      $region11: #{tpu_custom_call.1} parent=5 // pred_region
        %s207 = ssub.s32 %s15, 1
        // Predicated region
        $region13: #{tpu_custom_call.1} parent=11 // pred_check
          %p208 = pneg %p62
        $region14: #{tpu_custom_call.1} parent=11 // pred_check_branch
          %210 = sbr.rel (%p208) target = $region16
        $region15: #{tpu_custom_call.1} parent=11 // pred_region
          _
        $region16: #{tpu_custom_call.1} parent=11 // pred_fallthru
          _
        // Predicated region
        $region17: #{tpu_custom_call.1} parent=11 // pred_check
          %p211 = pneg %p83
        $region18: #{tpu_custom_call.1} parent=11 // pred_check_branch
          %213 = sbr.rel (%p211) target = $region20
        $region19: #{tpu_custom_call.1} parent=11 // pred_region
          _
        $region20: #{tpu_custom_call.1} parent=11 // pred_fallthru
          _
        // Predicated region
        $region21: #{tpu_custom_call.1} parent=11 // pred_check
          %p214 = pneg %p104
        $region22: #{tpu_custom_call.1} parent=11 // pred_check_branch
          %216 = sbr.rel (%p214) target = $region24
        $region23: #{tpu_custom_call.1} parent=11 // pred_region
          %s218 = ssub.s32 2048, 2048
          %219 = vsyncadd [#allocation3], %s218
          %s220 = sshll.u32 [#allocation2], 4
          %s221 = int_to_ptr.vmem [resolvable:$true] %s220
          %226 = dma.hbm_to_vmem [thread:$0]  %s3, 2048, %s221, [#allocation3], 128, 128, 8
        $region24: #{tpu_custom_call.1} parent=11 // pred_fallthru
          _
        // Predicated region
        $region25: #{tpu_custom_call.1} parent=11 // pred_check
          %p227 = pneg %p125
        $region26: #{tpu_custom_call.1} parent=11 // pred_check_branch
          %229 = sbr.rel (%p227) target = $region28
        $region27: #{tpu_custom_call.1} parent=11 // pred_region
          _
        $region28: #{tpu_custom_call.1} parent=11 // pred_fallthru
          _
        // Predicated region
        $region29: #{tpu_custom_call.1} parent=11 // pred_check
          %p230 = pneg %p146
        $region30: #{tpu_custom_call.1} parent=11 // pred_check_branch
          %232 = sbr.rel (%p230) target = $region32
        $region31: #{tpu_custom_call.1} parent=11 // pred_region
          %s234 = ssub.s32 2048, 2048
          %235 = vsyncadd [#allocation5], %s234
          %s236 = sshll.u32 [#allocation4], 4
          %s237 = int_to_ptr.vmem [resolvable:$true] %s236
          %242 = dma.hbm_to_vmem [thread:$0]  %s5, 2048, %s237, [#allocation5], 128, 128, 8
        $region32: #{tpu_custom_call.1} parent=11 // pred_fallthru
          _
        // Predicated region
        $region33: #{tpu_custom_call.1} parent=11 // pred_check
          %p243 = pneg %p167
        $region34: #{tpu_custom_call.1} parent=11 // pred_check_branch
          %245 = sbr.rel (%p243) target = $region36
        $region35: #{tpu_custom_call.1} parent=11 // pred_region
          _
        $region36: #{tpu_custom_call.1} parent=11 // pred_fallthru
          _
      $region12: #{tpu_custom_call.1} parent=5 // pred_fallthru
        _
      %p246 = scmp.lt.s32.totalorder %s15, 2
      // Predicated region
      $region37: #{tpu_custom_call.1} parent=5 // pred_check
        %p247 = pneg %p246
      $region38: #{tpu_custom_call.1} parent=5 // pred_check_branch
        %249 = sbr.rel (%p247) target = $region40
      $region39: #{tpu_custom_call.1} parent=5 // pred_region
        // Predicated region
        $region41: #{tpu_custom_call.1} parent=39 // pred_check
          %p250 = pneg %p35
        $region42: #{tpu_custom_call.1} parent=39 // pred_check_branch
          %252 = sbr.rel (%p250) target = $region44
        $region43: #{tpu_custom_call.1} parent=39 // pred_region
          %s253 = smul.u32 4, %s15
          %p254 = scmp.lt.s32.totalorder %s253, 7
          %s255 = scalar_select %p254, %s253, 7
          %s256 = smul.addr %s255, 8
          %s257 = scalar_lea.vmem %s0, %s256
          %s258 = smul.u32 4, %s15
        $region44: #{tpu_custom_call.1} parent=39 // pred_fallthru
          _
      $region40: #{tpu_custom_call.1} parent=5 // pred_fallthru
        _
      %p259 = scmp.le.s32.totalorder 1, %s15
      %p260 = scmp.lt.s32.totalorder %s15, 3
      %p261 = pnand %p259, %p260
      %p262 = pneg %p261
      // Predicated region
      $region45: #{tpu_custom_call.1} parent=5 // pred_check
        _
      $region46: #{tpu_custom_call.1} parent=5 // pred_check_branch
        %264 = sbr.rel (%p261) target = $region48
      $region47: #{tpu_custom_call.1} parent=5 // pred_region
        %s265 = ssub.s32 %s15, 1
        // Predicated region
        $region49: #{tpu_custom_call.1} parent=47 // pred_check
          %p266 = pneg %p104
        $region50: #{tpu_custom_call.1} parent=47 // pred_check_branch
          %268 = sbr.rel (%p266) target = $region52
        $region51: #{tpu_custom_call.1} parent=47 // pred_region
          %269 = dma.done [#allocation3], 2048
        $region52: #{tpu_custom_call.1} parent=47 // pred_fallthru
          _
        // Predicated region
        $region53: #{tpu_custom_call.1} parent=47 // pred_check
          %p270 = pneg %p146
        $region54: #{tpu_custom_call.1} parent=47 // pred_check_branch
          %272 = sbr.rel (%p270) target = $region56
        $region55: #{tpu_custom_call.1} parent=47 // pred_region
          %273 = dma.done [#allocation5], 2048
        $region56: #{tpu_custom_call.1} parent=47 // pred_fallthru
          _
        %s274 = smul.u32 4, %s20
        %p275 = scmp.lt.s32.totalorder %s274, 7
        %s276 = scalar_select %p275, %s274, 7
        %s277 = smul.addr %s276, 8
        %s278 = scalar_lea.vmem %s0, %s277
        %p279 = pneg %p41
        %p280 = pneg %p38
        %p281 = pneg %p62
        %p282 = pneg %p59
        %p283 = pneg %p83
        %p284 = pneg %p80
        %p285 = pneg %p104
        %p286 = pneg %p101
        %p287 = pneg %p125
        %p288 = pneg %p122
        %p289 = pneg %p146
        %p290 = pneg %p143
        %p291 = pneg %p167
        %p292 = pneg %p164
        %p293 = pneg %p193
        %p294 = pneg %p190
        %s295 = smul.u32 4, %s20
        %p296 = scmp.lt.s32.totalorder %s295, 7
        %s297 = scalar_select %p296, %s295, 7
        %s298 = smul.addr %s297, 8
        %s299 = scalar_lea.vmem %s7, %s298
        %s300 = smul.u32 4, %s20
        %p301 = scmp.lt.s32.totalorder %s300, 7
        %s302 = scalar_select %p301, %s300, 7
        %s303 = smul.addr %s302, 8
        %s304 = scalar_lea.vmem %s0, %s303
        %s305 = smul.u32 4, %s20
        %s306 = smul.u32 4, %s20
        %p307 = scmp.lt.s32.totalorder %s306, 7
        %s308 = scalar_select %p307, %s306, 7
        %s309 = smul.addr %s308, 8
        %s310 = scalar_lea.vmem %s7, %s309
        %s311 = smul.u32 4, %s20
        %v312 = vld [vmem:[%s304] sm:$0xff]
        %v313 = vld [vmem:[%s304 + $0x8] sm:$0xff]
        %v314 = vld [vmem:[%s304 + $0x10] sm:$0xff]
        %v315 = vld [vmem:[%s304 + $0x18] sm:$0xff]
        %v316 = vld [vmem:[%s1] sm:$0x1]
        %v317 = vld [vmem:[%s2] sm:$0x1]
        %319 = vset.pattern.permute.xlu0 0
        %320 = vperm.xlu0 %319, %v312
        %v321 = vpop.permute.xlu0 %320
        %324 = vset.pattern.permute.xlu0 0
        %325 = vperm.xlu0 %324, %v313
        %v326 = vpop.permute.xlu0 %325
        %329 = vset.pattern.permute.xlu0 0
        %330 = vperm.xlu0 %329, %v314
        %v331 = vpop.permute.xlu0 %330
        %334 = vset.pattern.permute.xlu0 0
        %335 = vperm.xlu0 %334, %v315
        %v336 = vpop.permute.xlu0 %335
        %v339 = vlaneseq
        %v340 = vshrl.u32 %v339, 7
        %v341 = vsub.s32 0, %v340
        %v342 = vrot.slane %v316, %v341
        %v344 = vmul.f32 %v321, %v342
        %v345 = vmul.f32 %v326, %v342
        %v346 = vmul.f32 %v331, %v342
        %v347 = vmul.f32 %v336, %v342
        %v349 = vlaneseq
        %v350 = vshrl.u32 %v349, 7
        %v351 = vsub.s32 0, %v350
        %v352 = vrot.slane %v317, %v351
        %v354 = vadd.f32 %v344, %v352
        %v355 = vadd.f32 %v345, %v352
        %v356 = vadd.f32 %v346, %v352
        %v357 = vadd.f32 %v347, %v352
        %v358 = vtanh.pop %v354
        %v359 = vtanh.pop %v355
        %v360 = vtanh.pop %v356
        %v361 = vtanh.pop %v357
        %v362 = vld [vmem:[#allocation2] sm:$0xff]
        %v363 = vld [vmem:[#allocation2 + $0x8] sm:$0xff]
        %v364 = vld [vmem:[#allocation2 + $0x10] sm:$0xff]
        %v365 = vld [vmem:[#allocation2 + $0x18] sm:$0xff]
        %v366 = vld [vmem:[#allocation2 + $0x20] sm:$0xff]
        %v367 = vld [vmem:[#allocation2 + $0x28] sm:$0xff]
        %v368 = vld [vmem:[#allocation2 + $0x30] sm:$0xff]
        %v369 = vld [vmem:[#allocation2 + $0x38] sm:$0xff]
        %v370 = vld [vmem:[#allocation2 + $0x40] sm:$0xff]
        %v371 = vld [vmem:[#allocation2 + $0x48] sm:$0xff]
        %v372 = vld [vmem:[#allocation2 + $0x50] sm:$0xff]
        %v373 = vld [vmem:[#allocation2 + $0x58] sm:$0xff]
        %v374 = vld [vmem:[#allocation2 + $0x60] sm:$0xff]
        %v375 = vld [vmem:[#allocation2 + $0x68] sm:$0xff]
        %v376 = vld [vmem:[#allocation2 + $0x70] sm:$0xff]
        %v377 = vld [vmem:[#allocation2 + $0x78] sm:$0xff]
        %v378 = vld [vmem:[%s4] sm:$0x1]
        %v380 = vlaneseq
        %v381 = vshrl.u32 %v380, 7
        %v382 = vsub.s32 0, %v381
        %v383 = vrot.slane %v378, %v382
        %385 = vmatprep.subr.mxu0 0.0
        %386 = vmatpush1.msra.mxu0 %v362
        %387 = vmatprep.subr.mxu0 0.0
        %388 = vmatpush1.msra.mxu0 %v363
        %389 = vmatprep.subr.mxu0 0.0
        %390 = vmatpush1.msra.mxu0 %v364
        %391 = vmatprep.subr.mxu0 0.0
        %392 = vmatpush1.msra.mxu0 %v365
        %393 = vmatprep.subr.mxu0 0.0
        %394 = vmatpush1.msra.mxu0 %v366
        %395 = vmatprep.subr.mxu0 0.0
        %396 = vmatpush1.msra.mxu0 %v367
        %397 = vmatprep.subr.mxu0 0.0
        %398 = vmatpush1.msra.mxu0 %v368
        %399 = vmatprep.subr.mxu0 0.0
        %400 = vmatpush1.msra.mxu0 %v369
        %401 = vmatprep.subr.mxu0 0.0
        %402 = vmatpush1.msra.mxu0 %v370
        %403 = vmatprep.subr.mxu0 0.0
        %404 = vmatpush1.msra.mxu0 %v371
        %405 = vmatprep.subr.mxu0 0.0
        %406 = vmatpush1.msra.mxu0 %v372
        %407 = vmatprep.subr.mxu0 0.0
        %408 = vmatpush1.msra.mxu0 %v373
        %409 = vmatprep.subr.mxu0 0.0
        %410 = vmatpush1.msra.mxu0 %v374
        %411 = vmatprep.subr.mxu0 0.0
        %412 = vmatpush1.msra.mxu0 %v375
        %413 = vmatprep.subr.mxu0 0.0
        %414 = vmatpush1.msra.mxu0 %v376
        %415 = vmatprep.subr.mxu0 0.0
        %416 = vmatpush1.msra.mxu0 %v377
        %417 = vmatprep.subr.mxu0 0.0
        %418 = vmatpush1.msra.mxu0 0.0
        %419 = vmatprep.subr.mxu0 0.0
        %420 = vmatpush1.msra.mxu0 0.0
        %421 = vmatprep.subr.mxu0 0.0
        %422 = vmatpush1.msra.mxu0 0.0
        %423 = vmatprep.subr.mxu0 0.0
        %424 = vmatpush1.msra.mxu0 0.0
        %425 = vmatprep.subr.mxu0 0.0
        %426 = vmatpush1.msra.mxu0 0.0
        %427 = vmatprep.subr.mxu0 0.0
        %428 = vmatpush1.msra.mxu0 0.0
        %429 = vmatprep.subr.mxu0 0.0
        %430 = vmatpush1.msra.mxu0 0.0
        %431 = vmatprep.subr.mxu0 0.0
        %432 = vmatpush1.msra.mxu0 0.0
        %433 = vmatprep.subr.mxu0 0.0
        %434 = vmatpush1.msra.mxu0 0.0
        %435 = vmatprep.subr.mxu0 0.0
        %436 = vmatpush1.msra.mxu0 0.0
        %437 = vmatprep.subr.mxu0 0.0
        %438 = vmatpush1.msra.mxu0 0.0
        %439 = vmatprep.subr.mxu0 0.0
        %440 = vmatpush1.msra.mxu0 0.0
        %441 = vmatprep.subr.mxu0 0.0
        %442 = vmatpush1.msra.mxu0 0.0
        %443 = vmatprep.subr.mxu0 0.0
        %444 = vmatpush1.msra.mxu0 0.0
        %445 = vmatprep.subr.mxu0 0.0
        %446 = vmatpush1.msra.mxu0 0.0
        %447 = vmatprep.subr.mxu0 0.0
        %448 = vmatpush1.msra.mxu0 0.0
        %449 = vmatprep.mubr.f32.mxu0 0.0
        %450 = vmatmul.mubr.f32.gmra.mrb[0].mxu0 %v358
        %v451 = vpop.f32.mrb[0].mxu0
        %v452 = vadd.f32 %v383, %v451
        %v453 = vpop.f32.mrb[0].mxu0
        %454 = vmatprep.mubr.f32.mxu0 0.0
        %455 = vmatmul.mubr.f32.gmra.mrb[0].mxu0 %v359
        %v456 = vpop.f32.mrb[0].mxu0
        %v457 = vadd.f32 %v383, %v456
        %v458 = vpop.f32.mrb[0].mxu0
        %459 = vmatprep.mubr.f32.mxu0 0.0
        %460 = vmatmul.mubr.f32.gmra.mrb[0].mxu0 %v360
        %v461 = vpop.f32.mrb[0].mxu0
        %v462 = vadd.f32 %v383, %v461
        %v463 = vpop.f32.mrb[0].mxu0
        %464 = vmatprep.mubr.f32.mxu0 0.0
        %465 = vmatmul.mubr.f32.gmra.mrb[0].mxu0 %v361
        %v466 = vpop.f32.mrb[0].mxu0
        %v467 = vadd.f32 %v383, %v466
        %v468 = vpop.f32.mrb[0].mxu0
        %469 = vdwg.mxu0
        %v470 = vtanh.pop %v452
        %v471 = vtanh.pop %v457
        %v472 = vtanh.pop %v462
        %v473 = vtanh.pop %v467
        %v474 = vld [vmem:[#allocation4] sm:$0xff]
        %v475 = vld [vmem:[#allocation4 + $0x8] sm:$0xff]
        %v476 = vld [vmem:[#allocation4 + $0x10] sm:$0xff]
        %v477 = vld [vmem:[#allocation4 + $0x18] sm:$0xff]
        %v478 = vld [vmem:[#allocation4 + $0x20] sm:$0xff]
        %v479 = vld [vmem:[#allocation4 + $0x28] sm:$0xff]
        %v480 = vld [vmem:[#allocation4 + $0x30] sm:$0xff]
        %v481 = vld [vmem:[#allocation4 + $0x38] sm:$0xff]
        %v482 = vld [vmem:[#allocation4 + $0x40] sm:$0xff]
        %v483 = vld [vmem:[#allocation4 + $0x48] sm:$0xff]
        %v484 = vld [vmem:[#allocation4 + $0x50] sm:$0xff]
        %v485 = vld [vmem:[#allocation4 + $0x58] sm:$0xff]
        %v486 = vld [vmem:[#allocation4 + $0x60] sm:$0xff]
        %v487 = vld [vmem:[#allocation4 + $0x68] sm:$0xff]
        %v488 = vld [vmem:[#allocation4 + $0x70] sm:$0xff]
        %v489 = vld [vmem:[#allocation4 + $0x78] sm:$0xff]
        %v490 = vld [vmem:[%s6] sm:$0x1]
        %v492 = vlaneseq
        %v493 = vshrl.u32 %v492, 7
        %v494 = vsub.s32 0, %v493
        %v495 = vrot.slane %v490, %v494
        %497 = vmatprep.subr.mxu0 0.0
        %498 = vmatpush1.msra.mxu0 %v474
        %499 = vmatprep.subr.mxu0 0.0
        %500 = vmatpush1.msra.mxu0 %v475
        %501 = vmatprep.subr.mxu0 0.0
        %502 = vmatpush1.msra.mxu0 %v476
        %503 = vmatprep.subr.mxu0 0.0
        %504 = vmatpush1.msra.mxu0 %v477
        %505 = vmatprep.subr.mxu0 0.0
        %506 = vmatpush1.msra.mxu0 %v478
        %507 = vmatprep.subr.mxu0 0.0
        %508 = vmatpush1.msra.mxu0 %v479
        %509 = vmatprep.subr.mxu0 0.0
        %510 = vmatpush1.msra.mxu0 %v480
        %511 = vmatprep.subr.mxu0 0.0
        %512 = vmatpush1.msra.mxu0 %v481
        %513 = vmatprep.subr.mxu0 0.0
        %514 = vmatpush1.msra.mxu0 %v482
        %515 = vmatprep.subr.mxu0 0.0
        %516 = vmatpush1.msra.mxu0 %v483
        %517 = vmatprep.subr.mxu0 0.0
        %518 = vmatpush1.msra.mxu0 %v484
        %519 = vmatprep.subr.mxu0 0.0
        %520 = vmatpush1.msra.mxu0 %v485
        %521 = vmatprep.subr.mxu0 0.0
        %522 = vmatpush1.msra.mxu0 %v486
        %523 = vmatprep.subr.mxu0 0.0
        %524 = vmatpush1.msra.mxu0 %v487
        %525 = vmatprep.subr.mxu0 0.0
        %526 = vmatpush1.msra.mxu0 %v488
        %527 = vmatprep.subr.mxu0 0.0
        %528 = vmatpush1.msra.mxu0 %v489
        %529 = vmatprep.subr.mxu0 0.0
        %530 = vmatpush1.msra.mxu0 0.0
        %531 = vmatprep.subr.mxu0 0.0
        %532 = vmatpush1.msra.mxu0 0.0
        %533 = vmatprep.subr.mxu0 0.0
        %534 = vmatpush1.msra.mxu0 0.0
        %535 = vmatprep.subr.mxu0 0.0
        %536 = vmatpush1.msra.mxu0 0.0
        %537 = vmatprep.subr.mxu0 0.0
        %538 = vmatpush1.msra.mxu0 0.0
        %539 = vmatprep.subr.mxu0 0.0
        %540 = vmatpush1.msra.mxu0 0.0
        %541 = vmatprep.subr.mxu0 0.0
        %542 = vmatpush1.msra.mxu0 0.0
        %543 = vmatprep.subr.mxu0 0.0
        %544 = vmatpush1.msra.mxu0 0.0
        %545 = vmatprep.subr.mxu0 0.0
        %546 = vmatpush1.msra.mxu0 0.0
        %547 = vmatprep.subr.mxu0 0.0
        %548 = vmatpush1.msra.mxu0 0.0
        %549 = vmatprep.subr.mxu0 0.0
        %550 = vmatpush1.msra.mxu0 0.0
        %551 = vmatprep.subr.mxu0 0.0
        %552 = vmatpush1.msra.mxu0 0.0
        %553 = vmatprep.subr.mxu0 0.0
        %554 = vmatpush1.msra.mxu0 0.0
        %555 = vmatprep.subr.mxu0 0.0
        %556 = vmatpush1.msra.mxu0 0.0
        %557 = vmatprep.subr.mxu0 0.0
        %558 = vmatpush1.msra.mxu0 0.0
        %559 = vmatprep.subr.mxu0 0.0
        %560 = vmatpush1.msra.mxu0 0.0
        %561 = vmatprep.mubr.f32.mxu0 0.0
        %562 = vmatmul.mubr.f32.gmra.mrb[0].mxu0 %v470
        %v563 = vpop.f32.mrb[0].mxu0
        %v564 = vadd.f32 %v495, %v563
        %v565 = vpop.f32.mrb[0].mxu0
        %566 = vmatprep.mubr.f32.mxu0 0.0
        %567 = vmatmul.mubr.f32.gmra.mrb[0].mxu0 %v471
        %v568 = vpop.f32.mrb[0].mxu0
        %v569 = vadd.f32 %v495, %v568
        %v570 = vpop.f32.mrb[0].mxu0
        %571 = vmatprep.mubr.f32.mxu0 0.0
        %572 = vmatmul.mubr.f32.gmra.mrb[0].mxu0 %v472
        %v573 = vpop.f32.mrb[0].mxu0
        %v574 = vadd.f32 %v495, %v573
        %v575 = vpop.f32.mrb[0].mxu0
        %576 = vmatprep.mubr.f32.mxu0 0.0
        %577 = vmatmul.mubr.f32.gmra.mrb[0].mxu0 %v473
        %v578 = vpop.f32.mrb[0].mxu0
        %v579 = vadd.f32 %v495, %v578
        %v580 = vpop.f32.mrb[0].mxu0
        %581 = vdwg.mxu0
        %vm582 = vcmask 7168
        %583 = vst.msk [vmem:[%s310] sm:$0xff] %vm582, %v564
        %584 = vst.msk [vmem:[%s310 + $0x8] sm:$0xff] %vm582, %v569
        %585 = vst.msk [vmem:[%s310 + $0x10] sm:$0xff] %vm582, %v574
        %586 = vst.msk [vmem:[%s310 + $0x18] sm:$0xff] %vm582, %v579
        %s587 = smul.u32 4, %s20
        %p588 = scmp.lt.s32.totalorder %s587, 7
        %s589 = scalar_select %p588, %s587, 7
        %s590 = smul.addr %s589, 8
        %s591 = scalar_lea.vmem %s7, %s590
        // Predicated region
        $region57: #{tpu_custom_call.1} parent=47 // pred_check
          %p592 = pneg %p190
        $region58: #{tpu_custom_call.1} parent=47 // pred_check_branch
          %594 = sbr.rel (%p592) target = $region60
        $region59: #{tpu_custom_call.1} parent=47 // pred_region
          %s595 = smul.u32 4, %s20
        $region60: #{tpu_custom_call.1} parent=47 // pred_fallthru
          _
      $region48: #{tpu_custom_call.1} parent=5 // pred_fallthru
        _
      %p596 = scmp.le.s32.totalorder 2, %s15
      // Predicated region
      $region61: #{tpu_custom_call.1} parent=5 // pred_check
        %p597 = pneg %p596
      $region62: #{tpu_custom_call.1} parent=5 // pred_check_branch
        %599 = sbr.rel (%p597) target = $region64
      $region63: #{tpu_custom_call.1} parent=5 // pred_region
        %s600 = ssub.s32 %s15, 2
        // Predicated region
        $region65: #{tpu_custom_call.1} parent=63 // pred_check
          %p601 = pneg %p196
        $region66: #{tpu_custom_call.1} parent=63 // pred_check_branch
          %603 = sbr.rel (%p601) target = $region68
        $region67: #{tpu_custom_call.1} parent=63 // pred_region
          %s604 = smul.u32 4, %s21
          %p605 = scmp.lt.s32.totalorder %s604, 7
          %s606 = scalar_select %p605, %s604, 7
          %s607 = smul.addr %s606, 8
          %s608 = scalar_lea.vmem %s7, %s607
        $region68: #{tpu_custom_call.1} parent=63 // pred_fallthru
          _
      $region64: #{tpu_custom_call.1} parent=5 // pred_fallthru
        _
    $region6: #{tpu_custom_call.1} parent=1 // loop_footer
      %s19 = sadd.s32 1, %s15
    $region7: #{tpu_custom_call.1} parent=1 // loop_footer_branch
      %14 = sbr.rel target = $region3
    $region8: #{tpu_custom_call.1} parent=1 // loop_exit
      _
    %609 = vsyncpa [#allocation3], 1
    %s610 = scalar_lea.sflag [#allocation3], 1
    %611 = vsyncpa %s610, 1
    %612 = vsyncpa [#allocation5], 1

</llo_original>
